<compile_context>
chip_gen: v7x
topology: tpu7x:2x2x1
jax: 0.10.0
libtpu: 0.0.40
codegen_flags: <defaults>
</compile_context>

<pallas_src>
import math
from functools import partial

import jax
import jax.numpy as jnp
from jax.experimental import pallas as pl
from jax.experimental.pallas import tpu as pltpu

_EPS = 1e-12  # torch.nn.functional.normalize default eps


# --------------------------------------------------------------------------- hardware
def _vmem_capacity_bytes():
    try:
        info = pltpu.get_tpu_info()
        return int(getattr(info, "vmem_capacity_bytes", 128 << 20))
    except Exception:
        return 128 << 20  # conservative default (v5e/v6e-like)


_VMEM_CAP = _vmem_capacity_bytes()
_IS_V7X_LIKE = _VMEM_CAP <= (64 << 20)            # v7x: 64 MiB VMEM/TC, ~3.2 TB/s HBM, 2 TCs
_TARGET_TILE_BYTES = (4 << 20) if _IS_V7X_LIKE else (2 << 20)
_MIN_GRID_STEPS = 4 if _IS_V7X_LIKE else 2        # >=2 steps per TensorCore on v7x
_VMEM_LIMIT_BYTES = 32 << 20                      # explicit scoped-VMEM budget, safe on all gens
_FEATURE_TILE_THRESHOLD = 16 << 20                # switch to the two-pass path above this


def _round_up(x, m):
    return ((x + m - 1) // m) * m


def _sublane(dtype):
    return {4: 8, 2: 16, 1: 32}.get(jnp.dtype(dtype).itemsize, 8)


def _cparams(*semantics):
    return pltpu.CompilerParams(dimension_semantics=tuple(semantics),
                                vmem_limit_bytes=_VMEM_LIMIT_BYTES)


def _choose_tile_rows(n_rows, n_lanes, dtype):
    """Row tile giving ~<=target-size blocks, rounded to sublane packing, with at least
    _MIN_GRID_STEPS grid steps when the input is large enough (pipelining + megacore)."""
    sub = _sublane(dtype)
    row_bytes = n_lanes * jnp.dtype(dtype).itemsize
    tile = max(sub, (max(1, _TARGET_TILE_BYTES // row_bytes) // sub) * sub)
    if n_rows >= _MIN_GRID_STEPS * sub:
        tile = min(tile, _round_up(pl.cdiv(n_rows, _MIN_GRID_STEPS), sub))
    if tile >= n_rows:
        tile = n_rows  # full-extent block is always a legal block shape
    return tile


# ---------------------------------------------------------------------------- kernels
def _l1_rows_kernel(x_ref, o_ref):
    """One (tile_rows, F) block: reduce |x| over lanes (f32 accum), scale in x.dtype."""
    x = x_ref[...]
    denom = jnp.sum(jnp.abs(x), axis=-1, keepdims=True, dtype=jnp.float32)
    denom = jnp.maximum(denom, _EPS)
    o_ref[...] = x * pl.reciprocal(denom, approx=True).astype(x.dtype)


def _l1_fold_kernel(x_ref, seg_ref, o_ref):
    """Lane-folded block: each physical row packs k = L//feat logical rows of `feat` lanes.

    `seg` is a resident (L, L) bf16 block-diagonal ones matrix (hoisted out of the
    kernel); abs(x) @ seg gives every lane its own logical-row L1 sum, already broadcast
    back across that row's lanes, with f32 accumulation on the MXU.
    """
    x = x_ref[...]
    ax = jnp.abs(x).astype(jnp.bfloat16)                       # bf16 -> native MXU rate
    denom = jnp.dot(ax, seg_ref[...], preferred_element_type=jnp.float32)
    denom = jnp.maximum(denom, _EPS)
    o_ref[...] = x * pl.reciprocal(denom, approx=True).astype(x.dtype)


def _l1_channels_kernel(x_ref, o_ref):
    """Native NCHW-style block (tile_n, C, tile_s): reduce |x| over the channel axis."""
    x = x_ref[...]
    denom = jnp.sum(jnp.abs(x), axis=-2, keepdims=True, dtype=jnp.float32)
    denom = jnp.maximum(denom, _EPS)
    o_ref[...] = x * pl.reciprocal(denom, approx=True).astype(x.dtype)


def _l1_sum_pass_kernel(x_ref, s_ref, *, f_total, tile_f):
    """Pass 1 of the feature-tiled path: accumulate per-row L1 sums over the F axis."""
    @pl.when(pl.program_id(1) == 0)
    def _():
        s_ref[...] = jnp.zeros_like(s_ref)
    xa = jnp.abs(x_ref[...]).astype(jnp.float32)
    if f_total % tile_f != 0:
        # Mask the unspecified lanes of the partial last feature block.
        col = pl.program_id(1) * tile_f + jax.lax.broadcasted_iota(jnp.int32, xa.shape, 1)
        xa = jnp.where(col < f_total, xa, 0.0)
    s_ref[...] += jnp.sum(xa, axis=-1, keepdims=True)


def _l1_scale_pass_kernel(x_ref, s_ref, o_ref):
    """Pass 2 of the feature-tiled path: apply the per-row scale."""
    x = x_ref[...]
    denom = jnp.maximum(s_ref[...], _EPS)
    o_ref[...] = x * pl.reciprocal(denom, approx=True).astype(x.dtype)


# --------------------------------------------------------------------------- wrappers
def _normalize_rows_folded(x2, L):
    """Small-F path: fold k rows into one lane-dense row of L = k*F lanes (L % 128 == 0)
    so stores stay unmasked — the biggest measured lever for F < 128."""
    B, F = x2.shape
    dtype = x2.dtype
    itemsize = jnp.dtype(dtype).itemsize
    k = L // F
    B_pad = _round_up(B, k)
    xp = x2 if B_pad == B else jnp.pad(x2, ((0, B_pad - B), (0, 0)))
    rows = B_pad // k
    xr = xp.reshape(rows, L)

    # Block-diagonal ones, built once on the host side (hoisted out of the kernel).
    grp = jnp.arange(L, dtype=jnp.int32) // F
    seg = (grp[:, None] == grp[None, :]).astype(jnp.bfloat16)

    tile = _choose_tile_rows(rows, L, dtype)
    ce = pl.CostEstimate(flops=2 * rows * L * L + 3 * rows * L,
                         transcendentals=rows * L,
                         bytes_accessed=2 * rows * L * itemsize + L * L * 2)
    yr = pl.pallas_call(
        _l1_fold_kernel,
        out_shape=jax.ShapeDtypeStruct((rows, L), dtype),
        grid_spec=pltpu.PrefetchScalarGridSpec(
            num_scalar_prefetch=0,
            grid=(pl.cdiv(rows, tile),),
            in_specs=[pl.BlockSpec((tile, L), lambda i: (i, 0)),
                      pl.BlockSpec((L, L), lambda i: (0, 0))],   # same block -> resident
            out_specs=pl.BlockSpec((tile, L), lambda i: (i, 0))),
        compiler_params=_cparams("parallel"),
        cost_estimate=ce,
    )(xr, seg)
    return yr.reshape(B_pad, F)[:B]


def _normalize_rows_feature_tiled(x2, tile_f=None):
    """Very wide F: two passes with the feature axis tiled (sum pass with an "arbitrary"
    F grid dim accumulating into a resident (tile_rows, 1) block, then a normalize pass)."""
    B, F = x2.shape
    dtype = x2.dtype
    itemsize = jnp.dtype(dtype).itemsize
    if tile_f is None:
        tile_f = 8192
    tile_f = max(128, (tile_f // 128) * 128)
    if tile_f >= F:
        tile_f = F                       # full-extent feature block is always legal
    sub = _sublane(dtype)
    tile_rows = max(sub, (max(1, _TARGET_TILE_BYTES // (tile_f * itemsize)) // sub) * sub)
    if tile_rows >= B:
        tile_rows = B
    grid = (pl.cdiv(B, tile_rows), pl.cdiv(F, tile_f))

    sums = pl.pallas_call(
        partial(_l1_sum_pass_kernel, f_total=F, tile_f=tile_f),
        out_shape=jax.ShapeDtypeStruct((B, 1), jnp.float32),
        grid_spec=pltpu.PrefetchScalarGridSpec(
            num_scalar_prefetch=0, grid=grid,
            in_specs=[pl.BlockSpec((tile_rows, tile_f), lambda i, j: (i, j))],
            out_specs=pl.BlockSpec((tile_rows, 1), lambda i, j: (i, 0))),
        compiler_params=_cparams("parallel", "arbitrary"),
        cost_estimate=pl.CostEstimate(flops=2 * B * F, transcendentals=0,
                                      bytes_accessed=B * F * itemsize + 4 * B),
    )(x2)

    return pl.pallas_call(
        _l1_scale_pass_kernel,
        out_shape=jax.ShapeDtypeStruct((B, F), dtype),
        grid_spec=pltpu.PrefetchScalarGridSpec(
            num_scalar_prefetch=0, grid=grid,
            in_specs=[pl.BlockSpec((tile_rows, tile_f), lambda i, j: (i, j)),
                      pl.BlockSpec((tile_rows, 1), lambda i, j: (i, 0))],
            out_specs=pl.BlockSpec((tile_rows, tile_f), lambda i, j: (i, j))),
        compiler_params=_cparams("parallel", "parallel"),
        cost_estimate=pl.CostEstimate(flops=B * F, transcendentals=B,
                                      bytes_accessed=2 * B * F * itemsize + 4 * B),
    )(x2, sums)


def _normalize_rows(x2):
    """L1-normalize every row of a 2-D array (rows, F)."""
    B, F = x2.shape
    dtype = x2.dtype
    itemsize = jnp.dtype(dtype).itemsize

    # Small / ragged F: lane-fold to keep loads and stores lane-dense (unmasked vst).
    if F % 128 != 0:
        L = math.lcm(F, 128)
        if L <= 1024:   # resident bf16 seg <= 2 MiB; matmul still hidden under DMA
            return _normalize_rows_folded(x2, L)
        # else: fall through (correct, just lane-sparse stores for odd large F).

    # Very wide F: a full-F block (x4 for in+out double-buffering) would blow scoped VMEM.
    if _sublane(dtype) * F * itemsize * 4 > _FEATURE_TILE_THRESHOLD:
        return _normalize_rows_feature_tiled(x2)

    # General path: batch-tiled, feature axis kept whole on lanes.
    tile = _choose_tile_rows(B, F, dtype)
    ce = pl.CostEstimate(flops=3 * B * F, transcendentals=B,
                         bytes_accessed=2 * B * F * itemsize)
    return pl.pallas_call(
        _l1_rows_kernel,
        out_shape=jax.ShapeDtypeStruct((B, F), dtype),
        grid_spec=pltpu.PrefetchScalarGridSpec(
            num_scalar_prefetch=0,
            grid=(pl.cdiv(B, tile),),
            in_specs=[pl.BlockSpec((tile, F), lambda i: (i, 0))],
            out_specs=pl.BlockSpec((tile, F), lambda i: (i, 0))),
        compiler_params=_cparams("parallel"),
        cost_estimate=ce,
    )(x2)


def _normalize_channels(x3):
    """Normalize over C of an (N, C, S) array in its native layout (no transposes)."""
    N, C, S = x3.shape
    dtype = x3.dtype
    itemsize = jnp.dtype(dtype).itemsize
    target = _TARGET_TILE_BYTES

    if S % 128 == 0:
        tile_s = min(S, max(128, ((target // max(1, C * itemsize)) // 128) * 128))
    else:
        tile_s = S  # full-extent spatial block (required by the (8,128) rule)
    tile_n = int(max(1, min(N, target // max(1, C * tile_s * itemsize))))
    total_bytes = N * C * S * itemsize
    if total_bytes > 2 * target and pl.cdiv(N, tile_n) * pl.cdiv(S, tile_s) < _MIN_GRID_STEPS:
        tile_n = max(1, pl.cdiv(N, _MIN_GRID_STEPS))
    grid = (pl.cdiv(N, tile_n), pl.cdiv(S, tile_s))

    ce = pl.CostEstimate(flops=3 * N * C * S, transcendentals=N * S,
                         bytes_accessed=2 * N * C * S * itemsize)
    return pl.pallas_call(
        _l1_channels_kernel,
        out_shape=jax.ShapeDtypeStruct((N, C, S), dtype),
        grid_spec=pltpu.PrefetchScalarGridSpec(
            num_scalar_prefetch=0, grid=grid,
            in_specs=[pl.BlockSpec((tile_n, C, tile_s), lambda n, s: (n, 0, s))],
            out_specs=pl.BlockSpec((tile_n, C, tile_s), lambda n, s: (n, 0, s))),
        compiler_params=_cparams("parallel", "parallel"),
        cost_estimate=ce,
    )(x3)


def l1_normalize(x, axis=1):
    """Pallas-backed equivalent of torch.nn.functional.normalize(x, p=1, dim=axis)."""
    ndim = x.ndim
    axis = axis % ndim
    if axis == ndim - 1:
        # (B, F)-style: dim already on lanes.
        F = x.shape[-1]
        rows = math.prod(x.shape[:-1]) if ndim > 1 else 1
        y2 = _normalize_rows(x.reshape(rows, F))
        return y2.reshape(x.shape)
    if axis == 1 and ndim >= 3:
        # NCHW-style dim=1: keep the native layout (channels on sublanes, spatial on
        # lanes) — avoids two full HBM transposes (~3x traffic) a moveaxis path pays.
        N, C = x.shape[0], x.shape[1]
        S = math.prod(x.shape[2:])
        y3 = _normalize_channels(x.reshape(N, C, S))
        return y3.reshape(x.shape)
    # Rare layouts (e.g. axis=0): transpose around the row kernel.
    # TODO(synk): add native-layout kernels for other non-last axes if they show up hot.
    xt = jnp.moveaxis(x, axis, -1)
    F = xt.shape[-1]
    rows = math.prod(xt.shape[:-1]) if xt.ndim > 1 else 1
    y2 = _normalize_rows(xt.reshape(rows, F))
    return jnp.moveaxis(y2.reshape(xt.shape), -1, axis)


if __name__ == "__main__":
    def ref_l1(x, axis=1):
        xf = x.astype(jnp.float32)
        denom = jnp.maximum(jnp.sum(jnp.abs(xf), axis=axis, keepdims=True), _EPS)
        return xf / denom

    keys = jax.random.split(jax.random.PRNGKey(0), 6)

    # 1) dlquantification-style (batch, features) with small F -> lane-folded path
    #    (resident bf16 seg matrix, bf16 MXU matmul, f32 accumulate).
    x1 = jax.random.normal(keys[0], (8, 32), dtype=jnp.float32)
    y1 = jax.block_until_ready(l1_normalize(x1))
    assert y1.shape == x1.shape and y1.dtype == x1.dtype
    assert jnp.allclose(y1.astype(jnp.float32), ref_l1(x1), rtol=1e-2, atol=1e-6)

    # 2) ragged batch, F >= 128 -> batch-tiled general path with a masked partial block.
    x2 = jax.random.normal(keys[1], (100, 256), dtype=jnp.float32)
    y2 = jax.block_until_ready(l1_normalize(x2))
    assert jnp.allclose(y2.astype(jnp.float32), ref_l1(x2), rtol=5e-3, atol=1e-6)

    # 3) bf16 input: denom accumulated in f32, scale applied in bf16 (no full upcast).
    x3 = jax.random.normal(keys[2], (64, 384)).astype(jnp.bfloat16)
    y3 = jax.block_until_ready(l1_normalize(x3))
    assert y3.dtype == jnp.bfloat16
    assert jnp.allclose(y3.astype(jnp.float32), ref_l1(x3), rtol=3e-2, atol=2e-3)

    # 4) N-D input with dim=1 (channel-wise L1 norm) like F.normalize on (N, C, H, W):
    #    native-layout kernel, no moveaxis transposes.
    x4 = jax.random.normal(keys[3], (2, 4, 16, 16), dtype=jnp.float32)
    y4 = jax.block_until_ready(l1_normalize(x4, axis=1))
    assert y4.shape == x4.shape
    assert jnp.allclose(y4, ref_l1(x4, axis=1), rtol=5e-3, atol=1e-6)

    # 5) two-pass feature-tiled path (exercised directly with a small forced tile_f,
    #    including the partial-last-feature-block masking).
    x5 = jax.random.normal(keys[4], (16, 640), dtype=jnp.float32)
    y5 = jax.block_until_ready(_normalize_rows_feature_tiled(x5, tile_f=256))
    assert jnp.allclose(y5, ref_l1(x5, axis=1), rtol=5e-3, atol=1e-6)

    # 6) non-standard axis (axis=0) -> transpose fallback around the row kernel.
    x6 = jax.random.normal(keys[5], (6, 10), dtype=jnp.float32)
    y6 = jax.block_until_ready(l1_normalize(x6, axis=0))
    assert jnp.allclose(y6, ref_l1(x6, axis=0), rtol=1e-2, atol=1e-6)

    print("KERNEL_OK")
</pallas_src>

<mosaic_0001>
module attributes {stable_mosaic.version = 11 : i64} {
  func.func @_l1_fold_kernel(%arg0: i32, %arg1: memref<2x128xf32, #tpu.memory_space<vmem>>, %arg2: memref<128x128xbf16, #tpu.memory_space<vmem>>, %arg3: memref<2x128xf32, #tpu.memory_space<vmem>>) attributes {dimension_semantics = [#tpu.dimension_semantics<parallel>], iteration_bounds = array<i64: 1>, scalar_prefetch = 0 : i64, scratch_operands = 0 : i64, tpu.core_type = #tpu.core_type<tc>, window_params = [{transform_indices = @transform_0, window_bounds = array<i64: 2, 128>}, {pipeline_mode = #tpu.pipeline_mode<synchronous>, transform_indices = @transform_1, window_bounds = array<i64: 128, 128>}, {transform_indices = @transform_2, window_bounds = array<i64: 2, 128>}]} {
    %c0 = arith.constant 0 : index
    %c0_0 = arith.constant 0 : index
    %0 = vector.load %arg1[%c0, %c0_0] : memref<2x128xf32, #tpu.memory_space<vmem>>, vector<2x128xf32>
    %1 = math.absf %0 : vector<2x128xf32>
    %2 = arith.truncf %1 : vector<2x128xf32> to vector<2x128xbf16>
    %c0_1 = arith.constant 0 : index
    %c0_2 = arith.constant 0 : index
    %3 = vector.load %arg2[%c0_1, %c0_2] : memref<128x128xbf16, #tpu.memory_space<vmem>>, vector<128x128xbf16>
    %cst = arith.constant dense<0.000000e+00> : vector<2x128xf32>
    %4 = tpu.matmul %2, %3, %cst {dimension_numbers = #tpu.dot_dimension_numbers<[1], [0], [0], [1], [0, 0, 1, 1], [], []>} : vector<2x128xbf16>, vector<128x128xbf16>, vector<2x128xf32> -> vector<2x128xf32>
    %cst_3 = arith.constant 9.99999996E-13 : f32
    %5 = vector.broadcast %cst_3 : f32 to vector<2x128xf32>
    %6 = arith.maximumf %4, %5 : vector<2x128xf32>
    %7 = tpu.reciprocal %6 {approx = true} : vector<2x128xf32> -> vector<2x128xf32>
    %8 = arith.mulf %0, %7 : vector<2x128xf32>
    %c0_4 = arith.constant 0 : index
    %c0_5 = arith.constant 0 : index
    %9 = vector.load %arg3[%c0_4, %c0_5] : memref<2x128xf32, #tpu.memory_space<vmem>>, vector<2x128xf32>
    tpu.vector_store %arg3[%c0_4, %c0_5], %8 {strides = array<i32>} : memref<2x128xf32, #tpu.memory_space<vmem>>, vector<2x128xf32>,
    return
  }
  func.func @transform_0(%arg0: i32) -> (i32, i32) {
    %c0_i32 = arith.constant 0 : i32
    %c0_i32_0 = arith.constant 0 : i32
    return %arg0, %c0_i32 : i32, i32
  }
  func.func @transform_1(%arg0: i32) -> (i32, i32) {
    %c0_i32 = arith.constant 0 : i32
    %c0_i32_0 = arith.constant 0 : i32
    %c0_i32_1 = arith.constant 0 : i32
    return %c0_i32, %c0_i32_0 : i32, i32
  }
  func.func @transform_2(%arg0: i32) -> (i32, i32) {
    %c0_i32 = arith.constant 0 : i32
    %c0_i32_0 = arith.constant 0 : i32
    return %arg0, %c0_i32 : i32, i32
  }
}

</mosaic_0001>

<llo_original>
// kernel: tpu_custom_call.1
$region0: #{tpu_custom_call.1}
  #allocation0 [shape = 'u32[]', space=smem, size = 0x4, offset = 0x4, fixed_abs, tag = 'smem constant byte address 0x4 - core index']
  #allocation1 [shape = 'u32[144,128]{1,0:T(1,128)}', space=vmem, size = 0x12000, scoped, tag = 'internal scratch']
  %s0 = inlined_call_operand.hbm [shape: f32[2,128], index: 0, kind: input, shape index: {}]
  %s1 = inlined_call_operand.hbm [shape: bf16[128,128], index: 1, kind: input, shape index: {}]
  %s2 = inlined_call_operand.hbm [shape: f32[2,128], index: 2, kind: output, shape index: {}]
  %s3 = sld [smem:[#allocation0]]
  $region26: #{tpu_custom_call.1} parent=0
    _
  %s5 = ssub.s32 1, %s3
  %s6 = scalar_select 0, %s5, %s3
  $region1: #{tpu_custom_call.1} parent=0
    #allocation2 [shape = 'u8[1024]{0}', space=vmem, size = 0x400, scoped, tag = 'input window, operand 0, single buffered']
    #allocation3 [shape = 's32[1]{0}', space=sflag, size = 0x4, scoped, tag = 'scoped memory for tpu_custom_call.1']
    #allocation4 [shape = 's32[1]{0}', space=sflag, size = 0x4, scoped, tag = 'scoped memory for tpu_custom_call.1']
    #allocation5 [shape = 'u8[32768]{0}', space=vmem, size = 0x8000, scoped, tag = 'input window, operand 1, single buffered']
    #allocation6 [shape = 's32[1]{0}', space=sflag, size = 0x4, scoped, tag = 'scoped memory for tpu_custom_call.1']
    #allocation7 [shape = 'u8[1024]{0}', space=vmem, size = 0x400, scoped, tag = 'output window, operand 0, single buffered']
    %7 = vsyncpa [#allocation3], 0
    %8 = vsyncpa [#allocation6], 0
    %9 = vsyncpa [#allocation4], 0
    // Predicated region
    $region2: #{tpu_custom_call.1} parent=1 // pred_check
      _
    $region3: #{tpu_custom_call.1} parent=1 // pred_check_branch
      %11 = sbr.rel (0) target = $region5
    $region4: #{tpu_custom_call.1} parent=1 // pred_region
      %s13 = ssub.s32 32, 32
      %14 = vsyncadd [#allocation3], %s13
      %s16 = sshll.u32 [#allocation2], 4
      %s17 = int_to_ptr.vmem [resolvable:$true] %s16
      %19 = dma.hbm_to_vmem [thread:$0]  %s0, 32, %s17, [#allocation3]
    $region5: #{tpu_custom_call.1} parent=1 // pred_fallthru
      _
    // Predicated region
    $region6: #{tpu_custom_call.1} parent=1 // pred_check
      _
    $region7: #{tpu_custom_call.1} parent=1 // pred_check_branch
      %21 = sbr.rel (0) target = $region9
    $region8: #{tpu_custom_call.1} parent=1 // pred_region
      %s23 = ssub.s32 1024, 1024
      %24 = vsyncadd [#allocation6], %s23
      %s25 = sshll.u32 [#allocation5], 4
      %s26 = int_to_ptr.vmem [resolvable:$true] %s25
      %31 = dma.hbm_to_vmem [thread:$0]  %s1, 1024, %s26, [#allocation6], 64, 64, 4
    $region9: #{tpu_custom_call.1} parent=1 // pred_fallthru
      _
    // Predicated region
    $region10: #{tpu_custom_call.1} parent=1 // pred_check
      _
    $region11: #{tpu_custom_call.1} parent=1 // pred_check_branch
      %33 = sbr.rel (0) target = $region13
    $region12: #{tpu_custom_call.1} parent=1 // pred_region
      %34 = dma.done [#allocation3], 32
    $region13: #{tpu_custom_call.1} parent=1 // pred_fallthru
      _
    // Predicated region
    $region14: #{tpu_custom_call.1} parent=1 // pred_check
      _
    $region15: #{tpu_custom_call.1} parent=1 // pred_check_branch
      %36 = sbr.rel (0) target = $region17
    $region16: #{tpu_custom_call.1} parent=1 // pred_region
      %37 = dma.done [#allocation6], 1024
    $region17: #{tpu_custom_call.1} parent=1 // pred_fallthru
      _
    %v39 = vld [vmem:[#allocation2] sm:$0x3]
    %v40 = vand.u32 2147483647, %v39
    %v41 = vpack.c.bf16 %v40, %v40
    %v42 = vld [vmem:[#allocation5] sm:$0xf]
    %v43 = vld [vmem:[#allocation5 + $0x4] sm:$0xf]
    %v44 = vld [vmem:[#allocation5 + $0x8] sm:$0xf]
    %v45 = vld [vmem:[#allocation5 + $0xc] sm:$0xf]
    %v46 = vld [vmem:[#allocation5 + $0x10] sm:$0xf]
    %v47 = vld [vmem:[#allocation5 + $0x14] sm:$0xf]
    %v48 = vld [vmem:[#allocation5 + $0x18] sm:$0xf]
    %v49 = vld [vmem:[#allocation5 + $0x1c] sm:$0xf]
    %v50 = vld [vmem:[#allocation5 + $0x20] sm:$0xf]
    %v51 = vld [vmem:[#allocation5 + $0x24] sm:$0xf]
    %v52 = vld [vmem:[#allocation5 + $0x28] sm:$0xf]
    %v53 = vld [vmem:[#allocation5 + $0x2c] sm:$0xf]
    %v54 = vld [vmem:[#allocation5 + $0x30] sm:$0xf]
    %v55 = vld [vmem:[#allocation5 + $0x34] sm:$0xf]
    %v56 = vld [vmem:[#allocation5 + $0x38] sm:$0xf]
    %v57 = vld [vmem:[#allocation5 + $0x3c] sm:$0xf]
    %v74 = vunpack.c.l.b16 %v42
    %v75 = vunpack.c.l.b16 %v43
    %v76 = vunpack.c.l.b16 %v44
    %v77 = vunpack.c.l.b16 %v45
    %v78 = vunpack.c.l.b16 %v46
    %v79 = vunpack.c.l.b16 %v47
    %v80 = vunpack.c.l.b16 %v48
    %v81 = vunpack.c.l.b16 %v49
    %v82 = vunpack.c.l.b16 %v50
    %v83 = vunpack.c.l.b16 %v51
    %v84 = vunpack.c.l.b16 %v52
    %v85 = vunpack.c.l.b16 %v53
    %v86 = vunpack.c.l.b16 %v54
    %v87 = vunpack.c.l.b16 %v55
    %v88 = vunpack.c.l.b16 %v56
    %v89 = vunpack.c.l.b16 %v57
    %v90 = vpack.c.b16 %v75, %v74
    %v91 = vpack.c.b16 %v77, %v76
    %v92 = vpack.c.b16 %v79, %v78
    %v93 = vpack.c.b16 %v81, %v80
    %v94 = vpack.c.b16 %v83, %v82
    %v95 = vpack.c.b16 %v85, %v84
    %v96 = vpack.c.b16 %v87, %v86
    %v97 = vpack.c.b16 %v89, %v88
    %106 = vmatprep.subr.bf16.mxu0 0
    %107 = vmatpush1.bf16.msra.mxu0 %v90
    %108 = vmatprep.subr.bf16.mxu0 0
    %109 = vmatpush1.bf16.msra.mxu0 %v91
    %110 = vmatprep.subr.bf16.mxu0 0
    %111 = vmatpush1.bf16.msra.mxu0 %v92
    %112 = vmatprep.subr.bf16.mxu0 0
    %113 = vmatpush1.bf16.msra.mxu0 %v93
    %114 = vmatprep.subr.bf16.mxu0 0
    %115 = vmatpush1.bf16.msra.mxu0 %v94
    %116 = vmatprep.subr.bf16.mxu0 0
    %117 = vmatpush1.bf16.msra.mxu0 %v95
    %118 = vmatprep.subr.bf16.mxu0 0
    %119 = vmatpush1.bf16.msra.mxu0 %v96
    %120 = vmatprep.subr.bf16.mxu0 0
    %121 = vmatpush1.bf16.msra.mxu0 %v97
    %122 = vmatprep.subr.bf16.mxu0 0
    %123 = vmatpush1.bf16.msra.mxu0 0
    %124 = vmatprep.subr.bf16.mxu0 0
    %125 = vmatpush1.bf16.msra.mxu0 0
    %126 = vmatprep.subr.bf16.mxu0 0
    %127 = vmatpush1.bf16.msra.mxu0 0
    %128 = vmatprep.subr.bf16.mxu0 0
    %129 = vmatpush1.bf16.msra.mxu0 0
    %130 = vmatprep.subr.bf16.mxu0 0
    %131 = vmatpush1.bf16.msra.mxu0 0
    %132 = vmatprep.subr.bf16.mxu0 0
    %133 = vmatpush1.bf16.msra.mxu0 0
    %134 = vmatprep.subr.bf16.mxu0 0
    %135 = vmatpush1.bf16.msra.mxu0 0
    %136 = vmatprep.subr.bf16.mxu0 0
    %137 = vmatpush1.bf16.msra.mxu0 0
    %138 = vmatprep.mubr.bf16.mxu0 0
    %139 = vmatmul.mubr.bf16.gmra.mrb[0].mxu0 %v41
    %v140 = vpop.f32.mrb[0].mxu0
    %v141 = vadd.f32 0.0, %v140
    %v142 = vpop.f32.mrb[0].mxu0
    %v143 = vpop.f32.mrb[0].mxu0
    %v144 = vpop.f32.mrb[0].mxu0
    %145 = vdwg.mxu0
    %v146 = vmax.f32 %v141, 1e-12
    %v147 = vrcp.pop %v146
    %v148 = vmul.f32 %v39, %v147
    %149 = vst [vmem:[#allocation7] sm:$0x3] %v148
    // Predicated region
    $region18: #{tpu_custom_call.1} parent=1 // pred_check
      _
    $region19: #{tpu_custom_call.1} parent=1 // pred_check_branch
      %151 = sbr.rel (0) target = $region21
    $region20: #{tpu_custom_call.1} parent=1 // pred_region
      %s153 = ssub.s32 32, 32
      %154 = vsyncadd [#allocation4], %s153
      %s156 = sshll.u32 [#allocation7], 4
      %s157 = int_to_ptr.vmem [resolvable:$true] %s156
      %159 = dma.vmem_to_hbm [thread:$0]  %s157, 32, %s2, [#allocation4]
    $region21: #{tpu_custom_call.1} parent=1 // pred_fallthru
      _
    // Predicated region
    $region22: #{tpu_custom_call.1} parent=1 // pred_check
      _
    $region23: #{tpu_custom_call.1} parent=1 // pred_check_branch
      %161 = sbr.rel (0) target = $region25
    $region24: #{tpu_custom_call.1} parent=1 // pred_region
      %162 = dma.done [#allocation4], 32
    $region25: #{tpu_custom_call.1} parent=1 // pred_fallthru
      _
    %163 = vsyncpa [#allocation3], 1
    %164 = vsyncpa [#allocation6], 1
    %165 = vsyncpa [#allocation4], 1

</llo_original>
